<compile_context>
chip_gen: v7x
topology: tpu7x:2x2x1
jax: 0.10.0
libtpu: 0.0.40
codegen_flags: <defaults>
</compile_context>

<pallas_src>
import functools

import numpy as np
import jax
import jax.numpy as jnp
from jax import lax
from jax.experimental import pallas as pl
from jax.experimental.pallas import tpu as pltpu

WEIGHT_REG = 1e-6      # weight_regularizer
DROPOUT_REG = 1e-5     # dropout_regularizer
EPS = 1e-7
TEMP = 0.1


def _round_up(x, m):
    return ((x + m - 1) // m) * m


def _concrete_dropout_linear_kernel(plogit_ref, x_ref, u_ref, w_ref, b_ref, out_ref):
    """One batch tile.

    plogit_ref: (1, 1) f32     x_ref, u_ref: (TM, K) f32
    w_ref: (N, K) f32 (resident)   b_ref: (1, N) f32 (resident)
    out_ref: (TM, N) f32
    """
    # ---- scalar side: computed once per tile on a (1,1), negligible EUP cost ----
    p = jax.nn.sigmoid(plogit_ref[...])                               # (1, 1)
    logit_p = jnp.log(p + EPS) - jnp.log(1.0 - p + EPS)               # (1, 1)
    inv_retain = 1.0 / (1.0 - p)                                      # (1, 1)

    # ---- concrete dropout mask (per-element hot path) ----
    # 1 fused log + 1 sigmoid per element; per-element divide by retain_prob replaced
    # by a broadcast multiply with the precomputed reciprocal.
    u = u_ref[...]
    drop_logit = logit_p + jnp.log((u + EPS) / (1.0 - u + EPS))
    drop_prob = jax.nn.sigmoid(drop_logit * (1.0 / TEMP))
    x_drop = x_ref[...] * (1.0 - drop_prob) * inv_retain              # (TM, K)

    # ---- layer(x_drop): Linear on the MXU, W kept in its native [N, K] layout ----
    acc = lax.dot_general(
        x_drop, w_ref[...],
        dimension_numbers=(((1,), (1,)), ((), ())),
        preferred_element_type=jnp.float32)                           # (TM, N)
    out_ref[...] = (acc + b_ref[...]).astype(out_ref.dtype)


def concrete_dropout_forward(x, w, b, p_logit, key, *, block_m=256):
    """x: [B, K] f32, w: [N, K] f32 (PyTorch Linear layout), b: [N] f32,
    p_logit: [1] f32, key: jax PRNG key.  Returns (out [B, N], reg scalar).

    block_m: batch tile.  256 is a v7x-safe default (64 MiB VMEM); on v5e/v6e
    (128 MiB VMEM) it can be swept up to 1024 for large K, N.
    """
    B, K = x.shape
    N, K2 = w.shape
    assert K == K2, (K, K2)

    x = jnp.asarray(x, jnp.float32)
    w = jnp.asarray(w, jnp.float32)                     # native [N, K]; no transpose
    b2 = jnp.asarray(b, jnp.float32).reshape(1, N)
    plogit2 = jnp.asarray(p_logit, jnp.float32).reshape(1, 1)

    # uniform noise, same semantics as torch.rand_like(x) (U[0, 1))
    u = jax.random.uniform(key, (B, K), dtype=jnp.float32)

    # ---- batch tiling: pad B to a multiple of the tile so the grid is exact ----
    tm = int(min(block_m, _round_up(B, 8)))
    b_pad = _round_up(B, tm)
    if b_pad != B:
        pad = ((0, b_pad - B), (0, 0))
        x_p = jnp.pad(x, pad)
        u_p = jnp.pad(u, pad)
    else:
        x_p, u_p = x, u
    grid = (b_pad // tm,)

    # VMEM budget: double-buffered x/u/out tiles + resident W/b (+1 MiB headroom),
    # clamped to be v7x-safe.
    vmem_bytes = 4 * (2 * tm * K * 2 + 2 * tm * N + N * K + N + 1) + (1 << 20)
    vmem_limit = int(min(64 * (1 << 20), max(32 * (1 << 20), vmem_bytes)))

    cost = pl.CostEstimate(
        flops=2 * b_pad * K * N,
        transcendentals=2 * b_pad * K,
        bytes_accessed=4 * (2 * b_pad * K + K * N + b_pad * N + N + 1))

    out_p = pl.pallas_call(
        _concrete_dropout_linear_kernel,
        out_shape=jax.ShapeDtypeStruct((b_pad, N), jnp.float32),
        grid=grid,
        in_specs=[
            pl.BlockSpec((1, 1), lambda i: (0, 0)),     # p_logit (resident)
            pl.BlockSpec((tm, K), lambda i: (i, 0)),    # x tile
            pl.BlockSpec((tm, K), lambda i: (i, 0)),    # uniform noise tile
            pl.BlockSpec((N, K), lambda i: (0, 0)),     # W (resident across the grid)
            pl.BlockSpec((1, N), lambda i: (0, 0)),     # bias (resident)
        ],
        out_specs=pl.BlockSpec((tm, N), lambda i: (i, 0)),
        compiler_params=pltpu.CompilerParams(
            dimension_semantics=("parallel",),          # shard batch tiles across TCs (v7x)
            vmem_limit_bytes=vmem_limit),
        cost_estimate=cost,
    )(plogit2, x_p, u_p, w, b2)
    out = out_p[:B]

    # ---- regularization term (scalar, hoisted out of the per-tile hot path) ----
    p = jax.nn.sigmoid(plogit2[0, 0])
    ssq = jnp.sum(w * w) + jnp.sum(b2 * b2)
    weights_regularizer = WEIGHT_REG * ssq / (1.0 - p)
    dropout_regularizer = p * jnp.log(p) + (1.0 - p) * jnp.log(1.0 - p)
    dropout_regularizer = dropout_regularizer * (DROPOUT_REG * float(K))
    reg = weights_regularizer + dropout_regularizer

    return out, reg, u   # u returned only so the demo can cross-check numerics


def _reference_forward(x, w, b, p_logit, u):
    """Pure-JAX transcription of the PyTorch module (same uniform noise u)."""
    p = jax.nn.sigmoid(p_logit[0])
    drop = (jnp.log(p + EPS) - jnp.log(1.0 - p + EPS)
            + jnp.log(u + EPS) - jnp.log(1.0 - u + EPS))
    drop = jax.nn.sigmoid(drop / TEMP)
    x_drop = x * (1.0 - drop) / (1.0 - p)
    out = x_drop @ w.T + b
    ssq = jnp.sum(w * w) + jnp.sum(b * b)
    wreg = WEIGHT_REG * ssq / (1.0 - p)
    dreg = (p * jnp.log(p) + (1.0 - p) * jnp.log(1.0 - p)) * (DROPOUT_REG * x.shape[1])
    return out, wreg + dreg


if __name__ == "__main__":
    # Small but hardware-friendly shapes: lane-dense output (N = 128) per perf review.
    B, K, N = 32, 64, 128

    key = jax.random.PRNGKey(0)
    kx, kw, kb, knoise = jax.random.split(key, 4)

    x = jax.random.normal(kx, (B, K), dtype=jnp.float32)

    # Deterministic "Linear(K, N)" parameters (PyTorch default-style uniform init)
    bound = 1.0 / np.sqrt(K)
    w = jax.random.uniform(kw, (N, K), minval=-bound, maxval=bound, dtype=jnp.float32)
    b = jax.random.uniform(kb, (N,), minval=-bound, maxval=bound, dtype=jnp.float32)

    # p_logit init: uniform(init_min, init_max) with init_min == init_max == 0.1
    # -> deterministic logit(0.1)
    p_logit = jnp.asarray([np.log(0.1) - np.log(1.0 - 0.1)], dtype=jnp.float32)

    out, reg, u_used = concrete_dropout_forward(x, w, b, p_logit, knoise)
    jax.block_until_ready((out, reg))

    assert out.shape == (B, N) and out.dtype == jnp.float32
    assert reg.shape == () and bool(jnp.isfinite(reg))

    # Cross-check against a pure-JAX transcription of the PyTorch module.
    out_ref, reg_ref = _reference_forward(x, w, b, p_logit, u_used)
    assert jnp.allclose(out, out_ref, atol=1e-4, rtol=1e-4), \
        float(jnp.max(jnp.abs(out - out_ref)))
    assert jnp.allclose(reg, reg_ref, atol=1e-6, rtol=1e-5)

    print("KERNEL_OK")
</pallas_src>

<mosaic_0001>
module attributes {stable_mosaic.version = 11 : i64} {
  func.func @_concrete_dropout_linear_kernel(%arg0: i32, %arg1: memref<1x1xf32, #tpu.memory_space<vmem>>, %arg2: memref<32x64xf32, #tpu.memory_space<vmem>>, %arg3: memref<32x64xf32, #tpu.memory_space<vmem>>, %arg4: memref<128x64xf32, #tpu.memory_space<vmem>>, %arg5: memref<1x128xf32, #tpu.memory_space<vmem>>, %arg6: memref<32x128xf32, #tpu.memory_space<vmem>>) attributes {dimension_semantics = [#tpu.dimension_semantics<parallel>], iteration_bounds = array<i64: 1>, scalar_prefetch = 0 : i64, scratch_operands = 0 : i64, tpu.core_type = #tpu.core_type<tc>, window_params = [{pipeline_mode = #tpu.pipeline_mode<synchronous>, transform_indices = @transform_0, window_bounds = array<i64: 1, 1>}, {transform_indices = @transform_1, window_bounds = array<i64: 32, 64>}, {transform_indices = @transform_2, window_bounds = array<i64: 32, 64>}, {pipeline_mode = #tpu.pipeline_mode<synchronous>, transform_indices = @transform_3, window_bounds = array<i64: 128, 64>}, {pipeline_mode = #tpu.pipeline_mode<synchronous>, transform_indices = @transform_4, window_bounds = array<i64: 1, 128>}, {transform_indices = @transform_5, window_bounds = array<i64: 32, 128>}]} {
    %c0 = arith.constant 0 : index
    %c0_0 = arith.constant 0 : index
    %0 = vector.load %arg1[%c0, %c0_0] : memref<1x1xf32, #tpu.memory_space<vmem>>, vector<1x1xf32>
    %1 = arith.negf %0 : vector<1x1xf32>
    %2 = math.exp %1 : vector<1x1xf32>
    %cst = arith.constant 1.000000e+00 : f32
    %3 = vector.broadcast %cst : f32 to vector<1x1xf32>
    %4 = arith.addf %3, %2 : vector<1x1xf32>
    %5 = arith.divf %3, %4 : vector<1x1xf32>
    %cst_1 = arith.constant 1.000000e-07 : f32
    %6 = vector.broadcast %cst_1 : f32 to vector<1x1xf32>
    %7 = arith.addf %5, %6 : vector<1x1xf32>
    %8 = math.log %7 : vector<1x1xf32>
    %cst_2 = arith.constant 1.000000e+00 : f32
    %9 = vector.broadcast %cst_2 : f32 to vector<1x1xf32>
    %10 = arith.subf %9, %5 : vector<1x1xf32>
    %cst_3 = arith.constant 1.000000e-07 : f32
    %11 = vector.broadcast %cst_3 : f32 to vector<1x1xf32>
    %12 = arith.addf %10, %11 : vector<1x1xf32>
    %13 = math.log %12 : vector<1x1xf32>
    %14 = arith.subf %8, %13 : vector<1x1xf32>
    %cst_4 = arith.constant 1.000000e+00 : f32
    %15 = vector.broadcast %cst_4 : f32 to vector<1x1xf32>
    %16 = arith.subf %15, %5 : vector<1x1xf32>
    %cst_5 = arith.constant 1.000000e+00 : f32
    %17 = vector.broadcast %cst_5 : f32 to vector<1x1xf32>
    %18 = arith.divf %17, %16 : vector<1x1xf32>
    %c0_6 = arith.constant 0 : index
    %c0_7 = arith.constant 0 : index
    %19 = vector.load %arg3[%c0_6, %c0_7] : memref<32x64xf32, #tpu.memory_space<vmem>>, vector<32x64xf32>
    %cst_8 = arith.constant 1.000000e-07 : f32
    %20 = vector.broadcast %cst_8 : f32 to vector<32x64xf32>
    %21 = arith.addf %19, %20 : vector<32x64xf32>
    %cst_9 = arith.constant 1.000000e+00 : f32
    %22 = vector.broadcast %cst_9 : f32 to vector<32x64xf32>
    %23 = arith.subf %22, %19 : vector<32x64xf32>
    %cst_10 = arith.constant 1.000000e-07 : f32
    %24 = vector.broadcast %cst_10 : f32 to vector<32x64xf32>
    %25 = arith.addf %23, %24 : vector<32x64xf32>
    %26 = arith.divf %21, %25 : vector<32x64xf32>
    %27 = math.log %26 : vector<32x64xf32>
    %28 = vector.broadcast %14 : vector<1x1xf32> to vector<32x64xf32>
    %29 = arith.addf %28, %27 : vector<32x64xf32>
    %cst_11 = arith.constant 1.000000e+01 : f32
    %30 = vector.broadcast %cst_11 : f32 to vector<32x64xf32>
    %31 = arith.mulf %29, %30 : vector<32x64xf32>
    %32 = arith.negf %31 : vector<32x64xf32>
    %33 = math.exp %32 : vector<32x64xf32>
    %cst_12 = arith.constant 1.000000e+00 : f32
    %34 = vector.broadcast %cst_12 : f32 to vector<32x64xf32>
    %35 = arith.addf %34, %33 : vector<32x64xf32>
    %36 = arith.divf %34, %35 : vector<32x64xf32>
    %c0_13 = arith.constant 0 : index
    %c0_14 = arith.constant 0 : index
    %37 = vector.load %arg2[%c0_13, %c0_14] : memref<32x64xf32, #tpu.memory_space<vmem>>, vector<32x64xf32>
    %cst_15 = arith.constant 1.000000e+00 : f32
    %38 = vector.broadcast %cst_15 : f32 to vector<32x64xf32>
    %39 = arith.subf %38, %36 : vector<32x64xf32>
    %40 = arith.mulf %37, %39 : vector<32x64xf32>
    %41 = vector.broadcast %18 : vector<1x1xf32> to vector<32x64xf32>
    %42 = arith.mulf %40, %41 : vector<32x64xf32>
    %c0_16 = arith.constant 0 : index
    %c0_17 = arith.constant 0 : index
    %43 = vector.load %arg4[%c0_16, %c0_17] : memref<128x64xf32, #tpu.memory_space<vmem>>, vector<128x64xf32>
    %cst_18 = arith.constant dense<0.000000e+00> : vector<32x128xf32>
    %44 = tpu.matmul %42, %43, %cst_18 {dimension_numbers = #tpu.dot_dimension_numbers<[1], [1], [0], [0], [0, 0, 1, 0], [], []>} : vector<32x64xf32>, vector<128x64xf32>, vector<32x128xf32> -> vector<32x128xf32>
    %c0_19 = arith.constant 0 : index
    %c0_20 = arith.constant 0 : index
    %45 = vector.load %arg5[%c0_19, %c0_20] : memref<1x128xf32, #tpu.memory_space<vmem>>, vector<1x128xf32>
    %46 = vector.broadcast %45 : vector<1x128xf32> to vector<32x128xf32>
    %47 = arith.addf %44, %46 : vector<32x128xf32>
    %c0_21 = arith.constant 0 : index
    %c0_22 = arith.constant 0 : index
    %48 = vector.load %arg6[%c0_21, %c0_22] : memref<32x128xf32, #tpu.memory_space<vmem>>, vector<32x128xf32>
    tpu.vector_store %arg6[%c0_21, %c0_22], %47 {strides = array<i32>} : memref<32x128xf32, #tpu.memory_space<vmem>>, vector<32x128xf32>,
    return
  }
  func.func @transform_0(%arg0: i32) -> (i32, i32) {
    %c0_i32 = arith.constant 0 : i32
    %c0_i32_0 = arith.constant 0 : i32
    %c0_i32_1 = arith.constant 0 : i32
    return %c0_i32, %c0_i32_0 : i32, i32
  }
  func.func @transform_1(%arg0: i32) -> (i32, i32) {
    %c0_i32 = arith.constant 0 : i32
    %c0_i32_0 = arith.constant 0 : i32
    return %arg0, %c0_i32 : i32, i32
  }
  func.func @transform_2(%arg0: i32) -> (i32, i32) {
    %c0_i32 = arith.constant 0 : i32
    %c0_i32_0 = arith.constant 0 : i32
    return %arg0, %c0_i32 : i32, i32
  }
  func.func @transform_3(%arg0: i32) -> (i32, i32) {
    %c0_i32 = arith.constant 0 : i32
    %c0_i32_0 = arith.constant 0 : i32
    %c0_i32_1 = arith.constant 0 : i32
    return %c0_i32, %c0_i32_0 : i32, i32
  }
  func.func @transform_4(%arg0: i32) -> (i32, i32) {
    %c0_i32 = arith.constant 0 : i32
    %c0_i32_0 = arith.constant 0 : i32
    %c0_i32_1 = arith.constant 0 : i32
    return %c0_i32, %c0_i32_0 : i32, i32
  }
  func.func @transform_5(%arg0: i32) -> (i32, i32) {
    %c0_i32 = arith.constant 0 : i32
    %c0_i32_0 = arith.constant 0 : i32
    return %arg0, %c0_i32 : i32, i32
  }
}

</mosaic_0001>

<llo_original>
// kernel: tpu_custom_call.1
$region0: #{tpu_custom_call.1}
  #allocation0 [shape = 'u32[]', space=smem, size = 0x4, offset = 0x4, fixed_abs, tag = 'smem constant byte address 0x4 - core index']
  #allocation1 [shape = 'u32[144,128]{1,0:T(1,128)}', space=vmem, size = 0x12000, scoped, tag = 'internal scratch']
  #allocation2 [shape = 'f32[1,1]{1,0:T(1,128)S(1)}', space=vmem, size = 0x200, scoped, tag = 'scoped memory for tpu_custom_call.1']
  %s0 = inlined_call_operand.<no memory space> [shape: f32[1,1], index: 0, kind: input, shape index: {}]
  %s1 = inlined_call_operand.vmem [shape: f32[32,64], index: 1, kind: input, shape index: {}]
  %s2 = inlined_call_operand.vmem [shape: f32[32,64], index: 2, kind: input, shape index: {}]
  %s3 = inlined_call_operand.vmem [shape: f32[128,64], index: 3, kind: input, shape index: {}]
  %s4 = inlined_call_operand.vmem [shape: f32[1,128], index: 4, kind: input, shape index: {}]
  %s5 = inlined_call_operand.hbm [shape: f32[32,128], index: 5, kind: output, shape index: {}]
  %s6 = sld [smem:[#allocation0]]
  $region30: #{tpu_custom_call.1} parent=0
    _
  %s8 = ssub.s32 1, %s6
  %s9 = scalar_select 0, %s8, %s6
  %v10 = vstv %s0
  %11 = vst [vmem:[#allocation2] sm:$0x1] %v10
  $region1: #{tpu_custom_call.1} parent=0
    #allocation3 [shape = 'u8[16384]{0}', space=vmem, size = 0x4000, scoped, tag = 'output window, operand 0, single buffered']
    #allocation4 [shape = 's32[1]{0}', space=sflag, size = 0x4, scoped, tag = 'scoped memory for tpu_custom_call.1']
    %12 = vsyncpa [#allocation4], 0
    // Predicated region
    $region2: #{tpu_custom_call.1} parent=1 // pred_check
      _
    $region3: #{tpu_custom_call.1} parent=1 // pred_check_branch
      %14 = sbr.rel (0) target = $region5
    $region4: #{tpu_custom_call.1} parent=1 // pred_region
      _
    $region5: #{tpu_custom_call.1} parent=1 // pred_fallthru
      _
    // Predicated region
    $region6: #{tpu_custom_call.1} parent=1 // pred_check
      _
    $region7: #{tpu_custom_call.1} parent=1 // pred_check_branch
      %16 = sbr.rel (0) target = $region9
    $region8: #{tpu_custom_call.1} parent=1 // pred_region
      _
    $region9: #{tpu_custom_call.1} parent=1 // pred_fallthru
      _
    // Predicated region
    $region10: #{tpu_custom_call.1} parent=1 // pred_check
      _
    $region11: #{tpu_custom_call.1} parent=1 // pred_check_branch
      %18 = sbr.rel (0) target = $region13
    $region12: #{tpu_custom_call.1} parent=1 // pred_region
      _
    $region13: #{tpu_custom_call.1} parent=1 // pred_fallthru
      _
    // Predicated region
    $region14: #{tpu_custom_call.1} parent=1 // pred_check
      _
    $region15: #{tpu_custom_call.1} parent=1 // pred_check_branch
      %20 = sbr.rel (0) target = $region17
    $region16: #{tpu_custom_call.1} parent=1 // pred_region
      _
    $region17: #{tpu_custom_call.1} parent=1 // pred_fallthru
      _
    // Predicated region
    $region18: #{tpu_custom_call.1} parent=1 // pred_check
      _
    $region19: #{tpu_custom_call.1} parent=1 // pred_check_branch
      %22 = sbr.rel (0) target = $region21
    $region20: #{tpu_custom_call.1} parent=1 // pred_region
      _
    $region21: #{tpu_custom_call.1} parent=1 // pred_fallthru
      _
    %v23 = vld [vmem:[#allocation2] sm:$0x1]
    %v24 = vxor.u32 %v23, 2147483648
    %v25 = vmul.f32 %v24, 1.442695
    %v26 = vpow.pop %v25
    %v27 = vadd.f32 %v26, 1.0
    %v28 = vrcp.pop %v27
    %v29 = vmul.f32 1.0, %v28
    %v30 = vadd.f32 %v29, 1e-07
    %v31 = vlog2.pop %v30
    %v32 = vmul.f32 %v31, 0.6931472
    %v33 = vsub.f32 1.0, %v29
    %v34 = vadd.f32 %v33, 1e-07
    %v35 = vlog2.pop %v34
    %v36 = vmul.f32 %v35, 0.6931472
    %v37 = vsub.f32 %v32, %v36
    %v38 = vrcp.pop %v33
    %v39 = vmul.f32 1.0, %v38
    %v40 = vld [vmem:[%s2] sm:$0xff]
    %v41 = vld [vmem:[%s2 + $0x8] sm:$0xff]
    %v42 = vld [vmem:[%s2 + $0x10] sm:$0xff]
    %v43 = vld [vmem:[%s2 + $0x18] sm:$0xff]
    %v44 = vadd.f32 %v40, 1e-07
    %v45 = vadd.f32 %v41, 1e-07
    %v46 = vadd.f32 %v42, 1e-07
    %v47 = vadd.f32 %v43, 1e-07
    %v48 = vsub.f32 1.0, %v40
    %v49 = vsub.f32 1.0, %v41
    %v50 = vsub.f32 1.0, %v42
    %v51 = vsub.f32 1.0, %v43
    %v52 = vadd.f32 %v48, 1e-07
    %v53 = vadd.f32 %v49, 1e-07
    %v54 = vadd.f32 %v50, 1e-07
    %v55 = vadd.f32 %v51, 1e-07
    %v56 = vrcp.pop %v52
    %v57 = vmul.f32 %v44, %v56
    %v58 = vrcp.pop %v53
    %v59 = vmul.f32 %v45, %v58
    %v60 = vrcp.pop %v54
    %v61 = vmul.f32 %v46, %v60
    %v62 = vrcp.pop %v55
    %v63 = vmul.f32 %v47, %v62
    %v64 = vlog2.pop %v57
    %v65 = vmul.f32 %v64, 0.6931472
    %v66 = vlog2.pop %v59
    %v67 = vmul.f32 %v66, 0.6931472
    %v68 = vlog2.pop %v61
    %v69 = vmul.f32 %v68, 0.6931472
    %v70 = vlog2.pop %v63
    %v71 = vmul.f32 %v70, 0.6931472
    %v73 = vlaneseq
    %v74 = vshrl.u32 %v73, 7
    %v75 = vsub.s32 0, %v74
    %v76 = vrot.slane %v37, %v75
    %77 = vset.pattern.permute.xlu0 0
    %78 = vperm.xlu0 %77, %v76
    %v79 = vpop.permute.xlu0 %78
    %v81 = vadd.f32 %v79, %v65
    %v82 = vadd.f32 %v79, %v67
    %v83 = vadd.f32 %v79, %v69
    %v84 = vadd.f32 %v79, %v71
    %v85 = vmul.f32 %v81, 10.0
    %v86 = vmul.f32 %v82, 10.0
    %v87 = vmul.f32 %v83, 10.0
    %v88 = vmul.f32 %v84, 10.0
    %v89 = vxor.u32 %v85, 2147483648
    %v90 = vxor.u32 %v86, 2147483648
    %v91 = vxor.u32 %v87, 2147483648
    %v92 = vxor.u32 %v88, 2147483648
    %v93 = vmul.f32 %v89, 1.442695
    %v94 = vpow.pop %v93
    %v95 = vmul.f32 %v90, 1.442695
    %v96 = vpow.pop %v95
    %v97 = vmul.f32 %v91, 1.442695
    %v98 = vpow.pop %v97
    %v99 = vmul.f32 %v92, 1.442695
    %v100 = vpow.pop %v99
    %v101 = vadd.f32 %v94, 1.0
    %v102 = vadd.f32 %v96, 1.0
    %v103 = vadd.f32 %v98, 1.0
    %v104 = vadd.f32 %v100, 1.0
    %v105 = vrcp.pop %v101
    %v106 = vmul.f32 1.0, %v105
    %v107 = vrcp.pop %v102
    %v108 = vmul.f32 1.0, %v107
    %v109 = vrcp.pop %v103
    %v110 = vmul.f32 1.0, %v109
    %v111 = vrcp.pop %v104
    %v112 = vmul.f32 1.0, %v111
    %v113 = vld [vmem:[%s1] sm:$0xff]
    %v114 = vld [vmem:[%s1 + $0x8] sm:$0xff]
    %v115 = vld [vmem:[%s1 + $0x10] sm:$0xff]
    %v116 = vld [vmem:[%s1 + $0x18] sm:$0xff]
    %v117 = vsub.f32 1.0, %v106
    %v118 = vsub.f32 1.0, %v108
    %v119 = vsub.f32 1.0, %v110
    %v120 = vsub.f32 1.0, %v112
    %v121 = vmul.f32 %v113, %v117
    %v122 = vmul.f32 %v114, %v118
    %v123 = vmul.f32 %v115, %v119
    %v124 = vmul.f32 %v116, %v120
    %v126 = vlaneseq
    %v127 = vshrl.u32 %v126, 7
    %v128 = vsub.s32 0, %v127
    %v129 = vrot.slane %v39, %v128
    %130 = vset.pattern.permute.xlu0 0
    %131 = vperm.xlu0 %130, %v129
    %v132 = vpop.permute.xlu0 %131
    %v134 = vmul.f32 %v121, %v132
    %v135 = vmul.f32 %v122, %v132
    %v136 = vmul.f32 %v123, %v132
    %v137 = vmul.f32 %v124, %v132
    %v138 = vld [vmem:[%s3] sm:$0xff]
    %v139 = vld [vmem:[%s3 + $0x8] sm:$0xff]
    %v140 = vld [vmem:[%s3 + $0x10] sm:$0xff]
    %v141 = vld [vmem:[%s3 + $0x18] sm:$0xff]
    %v142 = vld [vmem:[%s3 + $0x20] sm:$0xff]
    %v143 = vld [vmem:[%s3 + $0x28] sm:$0xff]
    %v144 = vld [vmem:[%s3 + $0x30] sm:$0xff]
    %v145 = vld [vmem:[%s3 + $0x38] sm:$0xff]
    %v146 = vld [vmem:[%s3 + $0x40] sm:$0xff]
    %v147 = vld [vmem:[%s3 + $0x48] sm:$0xff]
    %v148 = vld [vmem:[%s3 + $0x50] sm:$0xff]
    %v149 = vld [vmem:[%s3 + $0x58] sm:$0xff]
    %v150 = vld [vmem:[%s3 + $0x60] sm:$0xff]
    %v151 = vld [vmem:[%s3 + $0x68] sm:$0xff]
    %v152 = vld [vmem:[%s3 + $0x70] sm:$0xff]
    %v153 = vld [vmem:[%s3 + $0x78] sm:$0xff]
    %v154 = vld [vmem:[%s4] sm:$0x1]
    %v156 = vlaneseq
    %v157 = vshrl.u32 %v156, 7
    %v158 = vsub.s32 0, %v157
    %v159 = vrot.slane %v154, %v158
    %vm161 = vcmask 523264
    %v163 = vsel %vm161, %v134, 0
    %v166 = vsel %vm161, %v135, 0
    %v169 = vsel %vm161, %v136, 0
    %v172 = vsel %vm161, %v137, 0
    %v175 = vsel %vm161, %v138, 0
    %v178 = vsel %vm161, %v139, 0
    %v181 = vsel %vm161, %v140, 0
    %v184 = vsel %vm161, %v141, 0
    %v187 = vsel %vm161, %v142, 0
    %v190 = vsel %vm161, %v143, 0
    %v193 = vsel %vm161, %v144, 0
    %v196 = vsel %vm161, %v145, 0
    %v199 = vsel %vm161, %v146, 0
    %v202 = vsel %vm161, %v147, 0
    %v205 = vsel %vm161, %v148, 0
    %v208 = vsel %vm161, %v149, 0
    %v211 = vsel %vm161, %v150, 0
    %v214 = vsel %vm161, %v151, 0
    %v217 = vsel %vm161, %v152, 0
    %v220 = vsel %vm161, %v153, 0
    %222 = vmatprep.subr.mxu0 0.0
    %223 = vmatpush1.xpose.msra.mxu0 %v175
    %224 = vmatprep.subr.mxu0 0.0
    %225 = vmatpush1.xpose.msra.mxu0 %v178
    %226 = vmatprep.subr.mxu0 0.0
    %227 = vmatpush1.xpose.msra.mxu0 %v181
    %228 = vmatprep.subr.mxu0 0.0
    %229 = vmatpush1.xpose.msra.mxu0 %v184
    %230 = vmatprep.subr.mxu0 0.0
    %231 = vmatpush1.xpose.msra.mxu0 %v187
    %232 = vmatprep.subr.mxu0 0.0
    %233 = vmatpush1.xpose.msra.mxu0 %v190
    %234 = vmatprep.subr.mxu0 0.0
    %235 = vmatpush1.xpose.msra.mxu0 %v193
    %236 = vmatprep.subr.mxu0 0.0
    %237 = vmatpush1.xpose.msra.mxu0 %v196
    %238 = vmatprep.subr.mxu0 0.0
    %239 = vmatpush1.xpose.msra.mxu0 %v199
    %240 = vmatprep.subr.mxu0 0.0
    %241 = vmatpush1.xpose.msra.mxu0 %v202
    %242 = vmatprep.subr.mxu0 0.0
    %243 = vmatpush1.xpose.msra.mxu0 %v205
    %244 = vmatprep.subr.mxu0 0.0
    %245 = vmatpush1.xpose.msra.mxu0 %v208
    %246 = vmatprep.subr.mxu0 0.0
    %247 = vmatpush1.xpose.msra.mxu0 %v211
    %248 = vmatprep.subr.mxu0 0.0
    %249 = vmatpush1.xpose.msra.mxu0 %v214
    %250 = vmatprep.subr.mxu0 0.0
    %251 = vmatpush1.xpose.msra.mxu0 %v217
    %252 = vmatprep.subr.mxu0 0.0
    %253 = vmatpush1.xpose.msra.mxu0 %v220
    %254 = vmatprep.subr.mxu0 0.0
    %255 = vmatpush1.xpose.msra.mxu0 0.0
    %256 = vmatprep.subr.mxu0 0.0
    %257 = vmatpush1.xpose.msra.mxu0 0.0
    %258 = vmatprep.subr.mxu0 0.0
    %259 = vmatpush1.xpose.msra.mxu0 0.0
    %260 = vmatprep.subr.mxu0 0.0
    %261 = vmatpush1.xpose.msra.mxu0 0.0
    %262 = vmatprep.subr.mxu0 0.0
    %263 = vmatpush1.xpose.msra.mxu0 0.0
    %264 = vmatprep.subr.mxu0 0.0
    %265 = vmatpush1.xpose.msra.mxu0 0.0
    %266 = vmatprep.subr.mxu0 0.0
    %267 = vmatpush1.xpose.msra.mxu0 0.0
    %268 = vmatprep.subr.mxu0 0.0
    %269 = vmatpush1.xpose.msra.mxu0 0.0
    %270 = vmatprep.subr.mxu0 0.0
    %271 = vmatpush1.xpose.msra.mxu0 0.0
    %272 = vmatprep.subr.mxu0 0.0
    %273 = vmatpush1.xpose.msra.mxu0 0.0
    %274 = vmatprep.subr.mxu0 0.0
    %275 = vmatpush1.xpose.msra.mxu0 0.0
    %276 = vmatprep.subr.mxu0 0.0
    %277 = vmatpush1.xpose.msra.mxu0 0.0
    %278 = vmatprep.subr.mxu0 0.0
    %279 = vmatpush1.xpose.msra.mxu0 0.0
    %280 = vmatprep.subr.mxu0 0.0
    %281 = vmatpush1.xpose.msra.mxu0 0.0
    %282 = vmatprep.subr.mxu0 0.0
    %283 = vmatpush1.xpose.msra.mxu0 0.0
    %284 = vmatprep.subr.mxu0 0.0
    %285 = vmatpush1.xpose.msra.mxu0 0.0
    %286 = vmatprep.mubr.f32.mxu0 0.0
    %287 = vmatmul.mubr.f32.gmra.mrb[0].mxu0 %v163
    %v288 = vpop.f32.mrb[0].mxu0
    %v289 = vadd.f32 %v159, %v288
    %v290 = vpop.f32.mrb[0].mxu0
    %291 = vmatprep.mubr.f32.mxu0 0.0
    %292 = vmatmul.mubr.f32.gmra.mrb[0].mxu0 %v166
    %v293 = vpop.f32.mrb[0].mxu0
    %v294 = vadd.f32 %v159, %v293
    %v295 = vpop.f32.mrb[0].mxu0
    %296 = vmatprep.mubr.f32.mxu0 0.0
    %297 = vmatmul.mubr.f32.gmra.mrb[0].mxu0 %v169
    %v298 = vpop.f32.mrb[0].mxu0
    %v299 = vadd.f32 %v159, %v298
    %v300 = vpop.f32.mrb[0].mxu0
    %301 = vmatprep.mubr.f32.mxu0 0.0
    %302 = vmatmul.mubr.f32.gmra.mrb[0].mxu0 %v172
    %v303 = vpop.f32.mrb[0].mxu0
    %v304 = vadd.f32 %v159, %v303
    %v305 = vpop.f32.mrb[0].mxu0
    %306 = vdwg.mxu0
    %307 = vst [vmem:[#allocation3] sm:$0xff] %v289
    %308 = vst [vmem:[#allocation3 + $0x8] sm:$0xff] %v294
    %309 = vst [vmem:[#allocation3 + $0x10] sm:$0xff] %v299
    %310 = vst [vmem:[#allocation3 + $0x18] sm:$0xff] %v304
    // Predicated region
    $region22: #{tpu_custom_call.1} parent=1 // pred_check
      _
    $region23: #{tpu_custom_call.1} parent=1 // pred_check_branch
      %312 = sbr.rel (0) target = $region25
    $region24: #{tpu_custom_call.1} parent=1 // pred_region
      %s314 = ssub.s32 512, 512
      %315 = vsyncadd [#allocation4], %s314
      %s316 = sshll.u32 [#allocation3], 4
      %s317 = int_to_ptr.vmem [resolvable:$true] %s316
      %322 = dma.vmem_to_hbm [thread:$0]  %s317, 512, %s5, [#allocation4], 128, 128, 8
    $region25: #{tpu_custom_call.1} parent=1 // pred_fallthru
      _
    // Predicated region
    $region26: #{tpu_custom_call.1} parent=1 // pred_check
      _
    $region27: #{tpu_custom_call.1} parent=1 // pred_check_branch
      %324 = sbr.rel (0) target = $region29
    $region28: #{tpu_custom_call.1} parent=1 // pred_region
      %325 = dma.done [#allocation4], 512
    $region29: #{tpu_custom_call.1} parent=1 // pred_fallthru
      _
    %326 = vsyncpa [#allocation4], 1

</llo_original>
